<compile_context>
chip_gen: v5e
topology: v5e:2x2
jax: 0.10.0
libtpu: 0.0.40
codegen_flags: <defaults>
</compile_context>

<pallas_src>
import functools

import jax
import jax.numpy as jnp
from jax.experimental import pallas as pl
from jax.experimental.pallas import tpu as pltpu


def _round_up(x: int, m: int) -> int:
    return ((x + m - 1) // m) * m


def _critic_kernel(s_ref, a_ref,
                   w0_ref, b0_ref,
                   w1s_ref, w1a_ref, b1_ref,
                   w2t_ref, b2_ref,
                   out_ref):
    # Layer 0: Linear(dim_states, H0) + ReLU.
    h = jnp.dot(s_ref[...], w0_ref[...], preferred_element_type=jnp.float32)
    h = jnp.maximum(h + b0_ref[...], 0.0)

    # Layer 1: Linear(H0 + dim_actions, H1) + ReLU (concat as split matmul).
    h = (jnp.dot(h, w1s_ref[...], preferred_element_type=jnp.float32)
         + jnp.dot(a_ref[...], w1a_ref[...], preferred_element_type=jnp.float32)
         + b1_ref[...])
    h = jnp.maximum(h, 0.0)

    # Output head: (TB, H1) . (H1,) done as VPU multiply + XLU lane-reduce.
    # Avoids a transposed MXU contraction (and its potential weight-reload
    # passes); the XLU slot is idle here so the reduce is effectively free.
    head = jnp.sum(h * w2t_ref[...], axis=1, keepdims=True)
    out_ref[...] = head + b2_ref[0]          # b2 is a scalar living in SMEM


@functools.partial(jax.jit, static_argnames=("block_rows",))
def critic_forward(state, action, params, *, block_rows=8192):
    """Run the CriticValueNetwork forward pass with a single batch-tiled Pallas kernel."""
    w0, b0, w1, b1, w2, b2 = params
    ds, h0 = w0.shape
    h1 = w1.shape[1]
    da = action.shape[1]
    batch = state.shape[0]

    # Split W1 into the part applied to h0 and the part applied to the action,
    # equivalent to concatenating [h0, action] before the matmul.
    w1_s = w1[:h0, :]
    w1_a = w1[h0:, :]

    # Batch tile: multiple of 128; capped at ceil(batch/2) (rounded up to 128)
    # so v7x's two TensorCores each get at least one tile when batch > 128.
    tb_cap = _round_up(max(block_rows, 128), 128)
    tb_half = _round_up(pl.cdiv(batch, 2), 128)
    tb = max(128, min(tb_cap, tb_half))
    num_tiles = pl.cdiv(batch, tb)   # partial last block handled by Pallas masking

    def resident(shape):
        # Same block index for every grid step -> fetched once, stays in VMEM.
        return pl.BlockSpec(shape, lambda i: (0,) * len(shape))

    in_specs = [
        pl.BlockSpec((tb, ds), lambda i: (i, 0)),       # state tile (streamed)
        pl.BlockSpec((tb, da), lambda i: (i, 0)),       # action tile (streamed)
        resident((ds, h0)),                             # W0
        resident((1, h0)),                              # b0
        resident((h0, h1)),                             # W1[:H0]
        resident((da, h1)),                             # W1[H0:]
        resident((1, h1)),                              # b1
        resident((1, h1)),                              # W2 as a (1, H1) row
        pl.BlockSpec(memory_space=pltpu.MemorySpace.SMEM),  # b2 scalar
    ]
    out_spec = pl.BlockSpec((tb, 1), lambda i: (i, 0))

    flops = 2 * batch * (ds * h0 + (h0 + da) * h1 + h1)
    weight_bytes = (ds * h0 + h0 + (h0 + da) * h1 + h1 + h1 + 1) * 4
    bytes_accessed = batch * (ds + da + 1) * 4 + weight_bytes
    cost = pl.CostEstimate(flops=flops, transcendentals=0,
                           bytes_accessed=bytes_accessed)

    out = pl.pallas_call(
        _critic_kernel,
        out_shape=jax.ShapeDtypeStruct((batch, 1), jnp.float32),
        grid=(num_tiles,),
        in_specs=in_specs,
        out_specs=out_spec,
        compiler_params=pltpu.CompilerParams(
            dimension_semantics=("parallel",),
            vmem_limit_bytes=32 * 1024 * 1024),
        cost_estimate=cost,
    )(state, action,
      w0, b0.reshape(1, -1),
      w1_s, w1_a, b1.reshape(1, -1),
      w2.reshape(1, -1), b2.reshape(-1))

    return out


def init_params(key, dim_states, dim_actions, hidden_layer_sizes):
    """Deterministic init mimicking torch.nn.Linear defaults (uniform +-1/sqrt(fan_in)).

    Weights stored as (in_features, out_features) so the kernel computes x @ W + b.
    """
    h0, h1 = hidden_layer_sizes
    layer_dims = [
        (dim_states, h0),
        (h0 + dim_actions, h1),
        (h1, 1),
    ]
    params = []
    for (fan_in, fan_out) in layer_dims:
        key, kw, kb = jax.random.split(key, 3)
        bound = 1.0 / jnp.sqrt(jnp.float32(fan_in))
        w = jax.random.uniform(kw, (fan_in, fan_out), jnp.float32, -bound, bound)
        b = jax.random.uniform(kb, (fan_out,), jnp.float32, -bound, bound)
        params.extend([w, b])
    return tuple(params)


def critic_forward_ref(state, action, params):
    """Pure-JAX reference mirroring the PyTorch forward exactly."""
    w0, b0, w1, b1, w2, b2 = params
    out = jnp.maximum(state @ w0 + b0, 0.0)
    out = jnp.concatenate([out, action], axis=1)
    out = jnp.maximum(out @ w1 + b1, 0.0)
    out = out @ w2 + b2
    return out


if __name__ == "__main__":
    dim_states = 16
    dim_actions = 4
    hidden_layer_sizes = [32, 32]

    key = jax.random.PRNGKey(0)
    k_params, k_state, k_action = jax.random.split(key, 3)
    params = init_params(k_params, dim_states, dim_actions, hidden_layer_sizes)

    # Test 1: tiny batch (single partial 128-row tile, boundary masking).
    batch = 8
    state = jax.random.normal(k_state, (batch, dim_states), jnp.float32)
    action = jax.random.normal(k_action, (batch, dim_actions), jnp.float32)
    out = jax.block_until_ready(critic_forward(state, action, params))
    ref = critic_forward_ref(state, action, params)
    assert out.shape == (batch, 1), out.shape
    assert jnp.allclose(out, ref, atol=1e-5, rtol=1e-5), (out, ref)

    # Test 2: non-multiple-of-128 batch with a small forced tile -> 3-step grid
    # (exercises the batch pipeline, the parallel grid axis, and a masked tail).
    batch2 = 300
    k_state2, k_action2 = jax.random.split(jax.random.PRNGKey(1))
    state2 = jax.random.normal(k_state2, (batch2, dim_states), jnp.float32)
    action2 = jax.random.normal(k_action2, (batch2, dim_actions), jnp.float32)
    out2 = jax.block_until_ready(
        critic_forward(state2, action2, params, block_rows=128))
    ref2 = critic_forward_ref(state2, action2, params)
    assert out2.shape == (batch2, 1), out2.shape
    assert jnp.allclose(out2, ref2, atol=1e-5, rtol=1e-5)

    # Test 3: same batch with the default tile -> exercises the ceil(batch/2)
    # clamp that guarantees >= 2 tiles (v7x dual-TC path) plus a masked tail.
    out3 = jax.block_until_ready(critic_forward(state2, action2, params))
    assert out3.shape == (batch2, 1), out3.shape
    assert jnp.allclose(out3, ref2, atol=1e-5, rtol=1e-5)

    print("KERNEL_OK")
</pallas_src>

<mosaic_0001>
module attributes {stable_mosaic.version = 11 : i64} {
  func.func @_critic_kernel(%arg0: i32, %arg1: memref<128x16xf32, #tpu.memory_space<vmem>>, %arg2: memref<128x4xf32, #tpu.memory_space<vmem>>, %arg3: memref<16x32xf32, #tpu.memory_space<vmem>>, %arg4: memref<1x32xf32, #tpu.memory_space<vmem>>, %arg5: memref<32x32xf32, #tpu.memory_space<vmem>>, %arg6: memref<4x32xf32, #tpu.memory_space<vmem>>, %arg7: memref<1x32xf32, #tpu.memory_space<vmem>>, %arg8: memref<1x32xf32, #tpu.memory_space<vmem>>, %arg9: memref<1xf32, #tpu.memory_space<smem>>, %arg10: memref<128x1xf32, #tpu.memory_space<vmem>>) attributes {dimension_semantics = [#tpu.dimension_semantics<parallel>], iteration_bounds = array<i64: 1>, scalar_prefetch = 0 : i64, scratch_operands = 0 : i64, tpu.core_type = #tpu.core_type<tc>, window_params = [{transform_indices = @transform_0, window_bounds = array<i64: 128, 16>}, {transform_indices = @transform_1, window_bounds = array<i64: 128, 4>}, {pipeline_mode = #tpu.pipeline_mode<synchronous>, transform_indices = @transform_2, window_bounds = array<i64: 16, 32>}, {pipeline_mode = #tpu.pipeline_mode<synchronous>, transform_indices = @transform_3, window_bounds = array<i64: 1, 32>}, {pipeline_mode = #tpu.pipeline_mode<synchronous>, transform_indices = @transform_4, window_bounds = array<i64: 32, 32>}, {pipeline_mode = #tpu.pipeline_mode<synchronous>, transform_indices = @transform_5, window_bounds = array<i64: 4, 32>}, {pipeline_mode = #tpu.pipeline_mode<synchronous>, transform_indices = @transform_6, window_bounds = array<i64: 1, 32>}, {pipeline_mode = #tpu.pipeline_mode<synchronous>, transform_indices = @transform_7, window_bounds = array<i64: 1, 32>}, {transform_indices = @transform_8, window_bounds = array<i64: 1>}, {transform_indices = @transform_9, window_bounds = array<i64: 128, 1>}]} {
    %c0 = arith.constant 0 : index
    %c0_0 = arith.constant 0 : index
    %0 = vector.load %arg1[%c0, %c0_0] : memref<128x16xf32, #tpu.memory_space<vmem>>, vector<128x16xf32>
    %c0_1 = arith.constant 0 : index
    %c0_2 = arith.constant 0 : index
    %1 = vector.load %arg3[%c0_1, %c0_2] : memref<16x32xf32, #tpu.memory_space<vmem>>, vector<16x32xf32>
    %cst = arith.constant dense<0.000000e+00> : vector<128x32xf32>
    %2 = tpu.matmul %0, %1, %cst {dimension_numbers = #tpu.dot_dimension_numbers<[1], [0], [0], [1], [0, 0, 1, 1], [], []>} : vector<128x16xf32>, vector<16x32xf32>, vector<128x32xf32> -> vector<128x32xf32>
    %c0_3 = arith.constant 0 : index
    %c0_4 = arith.constant 0 : index
    %3 = vector.load %arg4[%c0_3, %c0_4] : memref<1x32xf32, #tpu.memory_space<vmem>>, vector<1x32xf32>
    %4 = vector.broadcast %3 : vector<1x32xf32> to vector<128x32xf32>
    %5 = arith.addf %2, %4 : vector<128x32xf32>
    %cst_5 = arith.constant 0.000000e+00 : f32
    %6 = vector.broadcast %cst_5 : f32 to vector<128x32xf32>
    %7 = arith.maximumf %5, %6 : vector<128x32xf32>
    %c0_6 = arith.constant 0 : index
    %c0_7 = arith.constant 0 : index
    %8 = vector.load %arg5[%c0_6, %c0_7] : memref<32x32xf32, #tpu.memory_space<vmem>>, vector<32x32xf32>
    %cst_8 = arith.constant dense<0.000000e+00> : vector<128x32xf32>
    %9 = tpu.matmul %7, %8, %cst_8 {dimension_numbers = #tpu.dot_dimension_numbers<[1], [0], [0], [1], [0, 0, 1, 1], [], []>} : vector<128x32xf32>, vector<32x32xf32>, vector<128x32xf32> -> vector<128x32xf32>
    %c0_9 = arith.constant 0 : index
    %c0_10 = arith.constant 0 : index
    %10 = vector.load %arg2[%c0_9, %c0_10] : memref<128x4xf32, #tpu.memory_space<vmem>>, vector<128x4xf32>
    %c0_11 = arith.constant 0 : index
    %c0_12 = arith.constant 0 : index
    %11 = vector.load %arg6[%c0_11, %c0_12] : memref<4x32xf32, #tpu.memory_space<vmem>>, vector<4x32xf32>
    %cst_13 = arith.constant dense<0.000000e+00> : vector<128x32xf32>
    %12 = tpu.matmul %10, %11, %cst_13 {dimension_numbers = #tpu.dot_dimension_numbers<[1], [0], [0], [1], [0, 0, 1, 1], [], []>} : vector<128x4xf32>, vector<4x32xf32>, vector<128x32xf32> -> vector<128x32xf32>
    %13 = arith.addf %9, %12 : vector<128x32xf32>
    %c0_14 = arith.constant 0 : index
    %c0_15 = arith.constant 0 : index
    %14 = vector.load %arg7[%c0_14, %c0_15] : memref<1x32xf32, #tpu.memory_space<vmem>>, vector<1x32xf32>
    %15 = vector.broadcast %14 : vector<1x32xf32> to vector<128x32xf32>
    %16 = arith.addf %13, %15 : vector<128x32xf32>
    %cst_16 = arith.constant 0.000000e+00 : f32
    %17 = vector.broadcast %cst_16 : f32 to vector<128x32xf32>
    %18 = arith.maximumf %16, %17 : vector<128x32xf32>
    %c0_17 = arith.constant 0 : index
    %c0_18 = arith.constant 0 : index
    %19 = vector.load %arg8[%c0_17, %c0_18] : memref<1x32xf32, #tpu.memory_space<vmem>>, vector<1x32xf32>
    %20 = vector.broadcast %19 : vector<1x32xf32> to vector<128x32xf32>
    %21 = arith.mulf %18, %20 : vector<128x32xf32>
    %cst_19 = arith.constant dense<0.000000e+00> : vector<128xf32>
    %22 = vector.multi_reduction <add>, %21, %cst_19 [1] : vector<128x32xf32> to vector<128xf32>
    %23 = vector.shape_cast %22 : vector<128xf32> to vector<128x1xf32>
    %c0_20 = arith.constant 0 : index
    %24 = memref.load %arg9[%c0_20] : memref<1xf32, #tpu.memory_space<smem>>
    %25 = vector.broadcast %24 : f32 to vector<128x1xf32>
    %26 = arith.addf %23, %25 : vector<128x1xf32>
    %c0_21 = arith.constant 0 : index
    %c0_22 = arith.constant 0 : index
    %27 = vector.load %arg10[%c0_21, %c0_22] : memref<128x1xf32, #tpu.memory_space<vmem>>, vector<128x1xf32>
    tpu.vector_store %arg10[%c0_21, %c0_22], %26 {strides = array<i32>} : memref<128x1xf32, #tpu.memory_space<vmem>>, vector<128x1xf32>,
    return
  }
  func.func @transform_0(%arg0: i32) -> (i32, i32) {
    %c0_i32 = arith.constant 0 : i32
    %c0_i32_0 = arith.constant 0 : i32
    return %arg0, %c0_i32 : i32, i32
  }
  func.func @transform_1(%arg0: i32) -> (i32, i32) {
    %c0_i32 = arith.constant 0 : i32
    %c0_i32_0 = arith.constant 0 : i32
    return %arg0, %c0_i32 : i32, i32
  }
  func.func @transform_2(%arg0: i32) -> (i32, i32) {
    %c0_i32 = arith.constant 0 : i32
    %c0_i32_0 = arith.constant 0 : i32
    %c0_i32_1 = arith.constant 0 : i32
    return %c0_i32, %c0_i32_0 : i32, i32
  }
  func.func @transform_3(%arg0: i32) -> (i32, i32) {
    %c0_i32 = arith.constant 0 : i32
    %c0_i32_0 = arith.constant 0 : i32
    %c0_i32_1 = arith.constant 0 : i32
    return %c0_i32, %c0_i32_0 : i32, i32
  }
  func.func @transform_4(%arg0: i32) -> (i32, i32) {
    %c0_i32 = arith.constant 0 : i32
    %c0_i32_0 = arith.constant 0 : i32
    %c0_i32_1 = arith.constant 0 : i32
    return %c0_i32, %c0_i32_0 : i32, i32
  }
  func.func @transform_5(%arg0: i32) -> (i32, i32) {
    %c0_i32 = arith.constant 0 : i32
    %c0_i32_0 = arith.constant 0 : i32
    %c0_i32_1 = arith.constant 0 : i32
    return %c0_i32, %c0_i32_0 : i32, i32
  }
  func.func @transform_6(%arg0: i32) -> (i32, i32) {
    %c0_i32 = arith.constant 0 : i32
    %c0_i32_0 = arith.constant 0 : i32
    %c0_i32_1 = arith.constant 0 : i32
    return %c0_i32, %c0_i32_0 : i32, i32
  }
  func.func @transform_7(%arg0: i32) -> (i32, i32) {
    %c0_i32 = arith.constant 0 : i32
    %c0_i32_0 = arith.constant 0 : i32
    %c0_i32_1 = arith.constant 0 : i32
    return %c0_i32, %c0_i32_0 : i32, i32
  }
  func.func @transform_8(%arg0: i32) -> i32 {
    %c0_i32 = arith.constant 0 : i32
    %c0_i32_0 = arith.constant 0 : i32
    return %c0_i32 : i32
  }
  func.func @transform_9(%arg0: i32) -> (i32, i32) {
    %c0_i32 = arith.constant 0 : i32
    %c0_i32_0 = arith.constant 0 : i32
    return %arg0, %c0_i32 : i32, i32
  }
}

</mosaic_0001>

<llo_original>
// kernel: critic_forward.1
$region0: #{critic_forward.1}
  #allocation0 [shape = 'u32[]', space=smem, size = 0x4, offset = 0x4, fixed_abs, tag = 'smem constant byte address 0x4 - core index']
  #allocation1 [shape = 'u32[72,128]{1,0:T(1,128)}', space=vmem, size = 0x9000, scoped, tag = 'internal scratch']
  #allocation2 [shape = 'f32[1]{0:T(128)S(6)}', space=smem, size = 0x200, scoped, tag = 'scoped memory for critic_forward.1']
  %s0 = inlined_call_operand.vmem [shape: f32[8,16], index: 0, kind: input, shape index: {}]
  %s1 = inlined_call_operand.vmem [shape: f32[8,4], index: 1, kind: input, shape index: {}]
  %s2 = inlined_call_operand.vmem [shape: f32[16,32], index: 2, kind: input, shape index: {}]
  %s3 = inlined_call_operand.vmem [shape: f32[1,32], index: 3, kind: input, shape index: {}]
  %s4 = inlined_call_operand.vmem [shape: f32[32,32], index: 4, kind: input, shape index: {}]
  %s5 = inlined_call_operand.vmem [shape: f32[4,32], index: 5, kind: input, shape index: {}]
  %s6 = inlined_call_operand.vmem [shape: f32[1,32], index: 6, kind: input, shape index: {}]
  %s7 = inlined_call_operand.vmem [shape: f32[1,32], index: 7, kind: input, shape index: {}]
  %s8 = inlined_call_operand.<no memory space> [shape: f32[1], index: 8, kind: input, shape index: {}]
  %s9 = inlined_call_operand.vmem [shape: f32[8,1], index: 9, kind: output, shape index: {}]
  %s10 = sld [smem:[#allocation0]]
  $region80: #{critic_forward.1} parent=0
    _
  %s12 = ssub.s32 1, %s10
  %s13 = scalar_select 0, %s12, %s10
  %14 = sst [smem:[#allocation2]] %s8
  $region1: #{critic_forward.1} parent=0
    #allocation3 [shape = 'u8[65536]{0}', space=vmem, size = 0x10000, scoped, tag = 'output window, operand 0, single buffered']
    // Predicated region
    $region2: #{critic_forward.1} parent=1 // pred_check
      _
    $region3: #{critic_forward.1} parent=1 // pred_check_branch
      %16 = sbr.rel (0) target = $region5
    $region4: #{critic_forward.1} parent=1 // pred_region
      _
    $region5: #{critic_forward.1} parent=1 // pred_fallthru
      _
    // Predicated region
    $region6: #{critic_forward.1} parent=1 // pred_check
      _
    $region7: #{critic_forward.1} parent=1 // pred_check_branch
      %18 = sbr.rel (0) target = $region9
    $region8: #{critic_forward.1} parent=1 // pred_region
      _
    $region9: #{critic_forward.1} parent=1 // pred_fallthru
      _
    // Predicated region
    $region10: #{critic_forward.1} parent=1 // pred_check
      _
    $region11: #{critic_forward.1} parent=1 // pred_check_branch
      %20 = sbr.rel (0) target = $region13
    $region12: #{critic_forward.1} parent=1 // pred_region
      _
    $region13: #{critic_forward.1} parent=1 // pred_fallthru
      _
    // Predicated region
    $region14: #{critic_forward.1} parent=1 // pred_check
      _
    $region15: #{critic_forward.1} parent=1 // pred_check_branch
      %22 = sbr.rel (0) target = $region17
    $region16: #{critic_forward.1} parent=1 // pred_region
      _
    $region17: #{critic_forward.1} parent=1 // pred_fallthru
      _
    // Predicated region
    $region18: #{critic_forward.1} parent=1 // pred_check
      _
    $region19: #{critic_forward.1} parent=1 // pred_check_branch
      %24 = sbr.rel (0) target = $region21
    $region20: #{critic_forward.1} parent=1 // pred_region
      _
    $region21: #{critic_forward.1} parent=1 // pred_fallthru
      _
    // Predicated region
    $region22: #{critic_forward.1} parent=1 // pred_check
      _
    $region23: #{critic_forward.1} parent=1 // pred_check_branch
      %26 = sbr.rel (0) target = $region25
    $region24: #{critic_forward.1} parent=1 // pred_region
      _
    $region25: #{critic_forward.1} parent=1 // pred_fallthru
      _
    // Predicated region
    $region26: #{critic_forward.1} parent=1 // pred_check
      _
    $region27: #{critic_forward.1} parent=1 // pred_check_branch
      %28 = sbr.rel (0) target = $region29
    $region28: #{critic_forward.1} parent=1 // pred_region
      _
    $region29: #{critic_forward.1} parent=1 // pred_fallthru
      _
    // Predicated region
    $region30: #{critic_forward.1} parent=1 // pred_check
      _
    $region31: #{critic_forward.1} parent=1 // pred_check_branch
      %30 = sbr.rel (0) target = $region33
    $region32: #{critic_forward.1} parent=1 // pred_region
      _
    $region33: #{critic_forward.1} parent=1 // pred_fallthru
      _
    // Predicated region
    $region34: #{critic_forward.1} parent=1 // pred_check
      _
    $region35: #{critic_forward.1} parent=1 // pred_check_branch
      %32 = sbr.rel (0) target = $region37
    $region36: #{critic_forward.1} parent=1 // pred_region
      _
    $region37: #{critic_forward.1} parent=1 // pred_fallthru
      _
    %v33 = vld [vmem:[%s0] sm:$0xff]
    %v34 = vld [vmem:[%s0 + $0x8] sm:$0xff]
    %v35 = vld [vmem:[%s0 + $0x10] sm:$0xff]
    %v36 = vld [vmem:[%s0 + $0x18] sm:$0xff]
    %v37 = vld [vmem:[%s0 + $0x20] sm:$0xff]
    %v38 = vld [vmem:[%s0 + $0x28] sm:$0xff]
    %v39 = vld [vmem:[%s0 + $0x30] sm:$0xff]
    %v40 = vld [vmem:[%s0 + $0x38] sm:$0xff]
    %v41 = vld [vmem:[%s0 + $0x40] sm:$0xff]
    %v42 = vld [vmem:[%s0 + $0x48] sm:$0xff]
    %v43 = vld [vmem:[%s0 + $0x50] sm:$0xff]
    %v44 = vld [vmem:[%s0 + $0x58] sm:$0xff]
    %v45 = vld [vmem:[%s0 + $0x60] sm:$0xff]
    %v46 = vld [vmem:[%s0 + $0x68] sm:$0xff]
    %v47 = vld [vmem:[%s0 + $0x70] sm:$0xff]
    %v48 = vld [vmem:[%s0 + $0x78] sm:$0xff]
    %v49 = vld [vmem:[%s2] sm:$0xff]
    %v50 = vld [vmem:[%s2 + $0x8] sm:$0xff]
    %v51 = vld [vmem:[%s3] sm:$0x1]
    %v53 = vperm.slane %v51, 0
    %vm55 = vcmask 130048
    %v57 = vsel %vm55, %v33, 0
    %v60 = vsel %vm55, %v34, 0
    %v63 = vsel %vm55, %v35, 0
    %v66 = vsel %vm55, %v36, 0
    %v69 = vsel %vm55, %v37, 0
    %v72 = vsel %vm55, %v38, 0
    %v75 = vsel %vm55, %v39, 0
    %v78 = vsel %vm55, %v40, 0
    %v81 = vsel %vm55, %v41, 0
    %v84 = vsel %vm55, %v42, 0
    %v87 = vsel %vm55, %v43, 0
    %v90 = vsel %vm55, %v44, 0
    %v93 = vsel %vm55, %v45, 0
    %v96 = vsel %vm55, %v46, 0
    %v99 = vsel %vm55, %v47, 0
    %v102 = vsel %vm55, %v48, 0
    %104 = vmatpush.msra.mxu0 0.0
    %105 = vmatpush.msra.mxu0 0.0
    %106 = vmatpush.msra.mxu0 0.0
    %107 = vmatpush.msra.mxu0 0.0
    %108 = vmatpush.msra.mxu0 0.0
    %109 = vmatpush.msra.mxu0 0.0
    %110 = vmatpush.msra.mxu0 0.0
    %111 = vmatpush.msra.mxu0 0.0
    %112 = vmatpush.msra.mxu0 0.0
    %113 = vmatpush.msra.mxu0 0.0
    %114 = vmatpush.msra.mxu0 0.0
    %115 = vmatpush.msra.mxu0 0.0
    %116 = vmatpush.msra.mxu0 0.0
    %117 = vmatpush.msra.mxu0 0.0
    %118 = vmatpush.msra.mxu0 %v50
    %119 = vmatpush.msra.mxu0 %v49
    %120 = vmatmul.f32.gmra.mxu0 %v57
    %v121 = vpop.f32.mrf.mxu0
    %v122 = vadd.f32 %v53, %v121
    %123 = vmatmul.f32.gmra.mxu0 %v60
    %v124 = vpop.f32.mrf.mxu0
    %v125 = vadd.f32 %v53, %v124
    %126 = vmatmul.f32.gmra.mxu0 %v63
    %v127 = vpop.f32.mrf.mxu0
    %v128 = vadd.f32 %v53, %v127
    %129 = vmatmul.f32.gmra.mxu0 %v66
    %v130 = vpop.f32.mrf.mxu0
    %v131 = vadd.f32 %v53, %v130
    %132 = vmatmul.f32.gmra.mxu0 %v69
    %v133 = vpop.f32.mrf.mxu0
    %v134 = vadd.f32 %v53, %v133
    %135 = vmatmul.f32.gmra.mxu0 %v72
    %v136 = vpop.f32.mrf.mxu0
    %v137 = vadd.f32 %v53, %v136
    %138 = vmatmul.f32.gmra.mxu0 %v75
    %v139 = vpop.f32.mrf.mxu0
    %v140 = vadd.f32 %v53, %v139
    %141 = vmatmul.f32.gmra.mxu0 %v78
    %v142 = vpop.f32.mrf.mxu0
    %v143 = vadd.f32 %v53, %v142
    %144 = vmatmul.f32.gmra.mxu0 %v81
    %v145 = vpop.f32.mrf.mxu0
    %v146 = vadd.f32 %v53, %v145
    %147 = vmatmul.f32.gmra.mxu0 %v84
    %v148 = vpop.f32.mrf.mxu0
    %v149 = vadd.f32 %v53, %v148
    %150 = vmatmul.f32.gmra.mxu0 %v87
    %v151 = vpop.f32.mrf.mxu0
    %v152 = vadd.f32 %v53, %v151
    %153 = vmatmul.f32.gmra.mxu0 %v90
    %v154 = vpop.f32.mrf.mxu0
    %v155 = vadd.f32 %v53, %v154
    %156 = vmatmul.f32.gmra.mxu0 %v93
    %v157 = vpop.f32.mrf.mxu0
    %v158 = vadd.f32 %v53, %v157
    %159 = vmatmul.f32.gmra.mxu0 %v96
    %v160 = vpop.f32.mrf.mxu0
    %v161 = vadd.f32 %v53, %v160
    %162 = vmatmul.f32.gmra.mxu0 %v99
    %v163 = vpop.f32.mrf.mxu0
    %v164 = vadd.f32 %v53, %v163
    %165 = vmatmul.f32.gmra.mxu0 %v102
    %v166 = vpop.f32.mrf.mxu0
    %v167 = vadd.f32 %v53, %v166
    %168 = vdwg.mxu0
    %v169 = vmax.f32 %v122, 0.0
    %v170 = vmax.f32 %v125, 0.0
    %v171 = vmax.f32 %v128, 0.0
    %v172 = vmax.f32 %v131, 0.0
    %v173 = vmax.f32 %v134, 0.0
    %v174 = vmax.f32 %v137, 0.0
    %v175 = vmax.f32 %v140, 0.0
    %v176 = vmax.f32 %v143, 0.0
    %v177 = vmax.f32 %v146, 0.0
    %v178 = vmax.f32 %v149, 0.0
    %v179 = vmax.f32 %v152, 0.0
    %v180 = vmax.f32 %v155, 0.0
    %v181 = vmax.f32 %v158, 0.0
    %v182 = vmax.f32 %v161, 0.0
    %v183 = vmax.f32 %v164, 0.0
    %v184 = vmax.f32 %v167, 0.0
    %v185 = vld [vmem:[%s4] sm:$0xff]
    %v186 = vld [vmem:[%s4 + $0x8] sm:$0xff]
    %v187 = vld [vmem:[%s4 + $0x10] sm:$0xff]
    %v188 = vld [vmem:[%s4 + $0x18] sm:$0xff]
    %v189 = vld [vmem:[%s1] sm:$0xff]
    %v190 = vld [vmem:[%s1 + $0x8] sm:$0xff]
    %v191 = vld [vmem:[%s1 + $0x10] sm:$0xff]
    %v192 = vld [vmem:[%s1 + $0x18] sm:$0xff]
    %v193 = vld [vmem:[%s1 + $0x20] sm:$0xff]
    %v194 = vld [vmem:[%s1 + $0x28] sm:$0xff]
    %v195 = vld [vmem:[%s1 + $0x30] sm:$0xff]
    %v196 = vld [vmem:[%s1 + $0x38] sm:$0xff]
    %v197 = vld [vmem:[%s1 + $0x40] sm:$0xff]
    %v198 = vld [vmem:[%s1 + $0x48] sm:$0xff]
    %v199 = vld [vmem:[%s1 + $0x50] sm:$0xff]
    %v200 = vld [vmem:[%s1 + $0x58] sm:$0xff]
    %v201 = vld [vmem:[%s1 + $0x60] sm:$0xff]
    %v202 = vld [vmem:[%s1 + $0x68] sm:$0xff]
    %v203 = vld [vmem:[%s1 + $0x70] sm:$0xff]
    %v204 = vld [vmem:[%s1 + $0x78] sm:$0xff]
    %v205 = vld [vmem:[%s5] sm:$0xf]
    %vm206 = vcmask 31744
    %v208 = vsel %vm206, %v189, 0
    %v211 = vsel %vm206, %v190, 0
    %v214 = vsel %vm206, %v191, 0
    %v217 = vsel %vm206, %v192, 0
    %v220 = vsel %vm206, %v193, 0
    %v223 = vsel %vm206, %v194, 0
    %v226 = vsel %vm206, %v195, 0
    %v229 = vsel %vm206, %v196, 0
    %v232 = vsel %vm206, %v197, 0
    %v235 = vsel %vm206, %v198, 0
    %v238 = vsel %vm206, %v199, 0
    %v241 = vsel %vm206, %v200, 0
    %v244 = vsel %vm206, %v201, 0
    %v247 = vsel %vm206, %v202, 0
    %v250 = vsel %vm206, %v203, 0
    %v253 = vsel %vm206, %v204, 0
    %vm255 = vcmask 1043456
    %v257 = vsel %vm255, %v205, 0
    %259 = vmatpush.msra.mxu0 0.0
    %260 = vmatpush.msra.mxu0 0.0
    %261 = vmatpush.msra.mxu0 0.0
    %262 = vmatpush.msra.mxu0 0.0
    %263 = vmatpush.msra.mxu0 0.0
    %264 = vmatpush.msra.mxu0 0.0
    %265 = vmatpush.msra.mxu0 0.0
    %266 = vmatpush.msra.mxu0 0.0
    %267 = vmatpush.msra.mxu0 0.0
    %268 = vmatpush.msra.mxu0 0.0
    %269 = vmatpush.msra.mxu0 0.0
    %270 = vmatpush.msra.mxu0 0.0
    %271 = vmatpush.msra.mxu0 0.0
    %272 = vmatpush.msra.mxu0 0.0
    %273 = vmatpush.msra.mxu0 0.0
    %274 = vmatpush.msra.mxu0 %v257
    %275 = vmatmul.f32.gmra.mxu0 %v208
    %v276 = vpop.f32.mrf.mxu0
    %v277 = vadd.f32 0.0, %v276
    %278 = vmatmul.f32.gmra.mxu0 %v211
    %v279 = vpop.f32.mrf.mxu0
    %v280 = vadd.f32 0.0, %v279
    %281 = vmatmul.f32.gmra.mxu0 %v214
    %v282 = vpop.f32.mrf.mxu0
    %v283 = vadd.f32 0.0, %v282
    %284 = vmatmul.f32.gmra.mxu0 %v217
    %v285 = vpop.f32.mrf.mxu0
    %v286 = vadd.f32 0.0, %v285
    %287 = vmatmul.f32.gmra.mxu0 %v220
    %v288 = vpop.f32.mrf.mxu0
    %v289 = vadd.f32 0.0, %v288
    %290 = vmatmul.f32.gmra.mxu0 %v223
    %v291 = vpop.f32.mrf.mxu0
    %v292 = vadd.f32 0.0, %v291
    %293 = vmatmul.f32.gmra.mxu0 %v226
    %v294 = vpop.f32.mrf.mxu0
    %v295 = vadd.f32 0.0, %v294
    %296 = vmatmul.f32.gmra.mxu0 %v229
    %v297 = vpop.f32.mrf.mxu0
    %v298 = vadd.f32 0.0, %v297
    %299 = vmatmul.f32.gmra.mxu0 %v232
    %v300 = vpop.f32.mrf.mxu0
    %v301 = vadd.f32 0.0, %v300
    %302 = vmatmul.f32.gmra.mxu0 %v235
    %v303 = vpop.f32.mrf.mxu0
    %v304 = vadd.f32 0.0, %v303
    %305 = vmatmul.f32.gmra.mxu0 %v238
    %v306 = vpop.f32.mrf.mxu0
    %v307 = vadd.f32 0.0, %v306
    %308 = vmatmul.f32.gmra.mxu0 %v241
    %v309 = vpop.f32.mrf.mxu0
    %v310 = vadd.f32 0.0, %v309
    %311 = vmatmul.f32.gmra.mxu0 %v244
    %v312 = vpop.f32.mrf.mxu0
    %v313 = vadd.f32 0.0, %v312
    %314 = vmatmul.f32.gmra.mxu0 %v247
    %v315 = vpop.f32.mrf.mxu0
    %v316 = vadd.f32 0.0, %v315
    %317 = vmatmul.f32.gmra.mxu0 %v250
    %v318 = vpop.f32.mrf.mxu0
    %v319 = vadd.f32 0.0, %v318
    %320 = vmatmul.f32.gmra.mxu0 %v253
    %v321 = vpop.f32.mrf.mxu0
    %v322 = vadd.f32 0.0, %v321
    %323 = vdwg.mxu0
    %vm324 = vcmask 261120
    %v326 = vsel %vm324, %v169, 0
    %v329 = vsel %vm324, %v170, 0
    %v332 = vsel %vm324, %v171, 0
    %v335 = vsel %vm324, %v172, 0
    %v338 = vsel %vm324, %v173, 0
    %v341 = vsel %vm324, %v174, 0
    %v344 = vsel %vm324, %v175, 0
    %v347 = vsel %vm324, %v176, 0
    %v350 = vsel %vm324, %v177, 0
    %v353 = vsel %vm324, %v178, 0
    %v356 = vsel %vm324, %v179, 0
    %v359 = vsel %vm324, %v180, 0
    %v362 = vsel %vm324, %v181, 0
    %v365 = vsel %vm324, %v182, 0
    %v368 = vsel %vm324, %v183, 0
    %v371 = vsel %vm324, %v184, 0
    %373 = vmatpush.msra.mxu0 0.0
    %374 = vmatpush.msra.mxu0 0.0
    %375 = vmatpush.msra.mxu0 0.0
    %376 = vmatpush.msra.mxu0 0.0
    %377 = vmatpush.msra.mxu0 0.0
    %378 = vmatpush.msra.mxu0 0.0
    %379 = vmatpush.msra.mxu0 0.0
    %380 = vmatpush.msra.mxu0 0.0
    %381 = vmatpush.msra.mxu0 0.0
    %382 = vmatpush.msra.mxu0 0.0
    %383 = vmatpush.msra.mxu0 0.0
    %384 = vmatpush.msra.mxu0 0.0
    %385 = vmatpush.msra.mxu0 %v188
    %386 = vmatpush.msra.mxu0 %v187
    %387 = vmatpush.msra.mxu0 %v186
    %388 = vmatpush.msra.mxu0 %v185
    %389 = vmatmul.f32.gmra.mxu0 %v326
    %v390 = vpop.f32.mrf.mxu0
    %v391 = vadd.f32 %v277, %v390
    %392 = vmatmul.f32.gmra.mxu0 %v329
    %v393 = vpop.f32.mrf.mxu0
    %v394 = vadd.f32 %v280, %v393
    %395 = vmatmul.f32.gmra.mxu0 %v332
    %v396 = vpop.f32.mrf.mxu0
    %v397 = vadd.f32 %v283, %v396
    %398 = vmatmul.f32.gmra.mxu0 %v335
    %v399 = vpop.f32.mrf.mxu0
    %v400 = vadd.f32 %v286, %v399
    %401 = vmatmul.f32.gmra.mxu0 %v338
    %v402 = vpop.f32.mrf.mxu0
    %v403 = vadd.f32 %v289, %v402
    %404 = vmatmul.f32.gmra.mxu0 %v341
    %v405 = vpop.f32.mrf.mxu0
    %v406 = vadd.f32 %v292, %v405
    %407 = vmatmul.f32.gmra.mxu0 %v344
    %v408 = vpop.f32.mrf.mxu0
    %v409 = vadd.f32 %v295, %v408
    %410 = vmatmul.f32.gmra.mxu0 %v347
    %v411 = vpop.f32.mrf.mxu0
    %v412 = vadd.f32 %v298, %v411
    %413 = vmatmul.f32.gmra.mxu0 %v350
    %v414 = vpop.f32.mrf.mxu0
    %v415 = vadd.f32 %v301, %v414
    %416 = vmatmul.f32.gmra.mxu0 %v353
    %v417 = vpop.f32.mrf.mxu0
    %v418 = vadd.f32 %v304, %v417
    %419 = vmatmul.f32.gmra.mxu0 %v356
    %v420 = vpop.f32.mrf.mxu0
    %v421 = vadd.f32 %v307, %v420
    %422 = vmatmul.f32.gmra.mxu0 %v359
    %v423 = vpop.f32.mrf.mxu0
    %v424 = vadd.f32 %v310, %v423
    %425 = vmatmul.f32.gmra.mxu0 %v362
    %v426 = vpop.f32.mrf.mxu0
    %v427 = vadd.f32 %v313, %v426
    %428 = vmatmul.f32.gmra.mxu0 %v365
    %v429 = vpop.f32.mrf.mxu0
    %v430 = vadd.f32 %v316, %v429
    %431 = vmatmul.f32.gmra.mxu0 %v368
    %v432 = vpop.f32.mrf.mxu0
    %v433 = vadd.f32 %v319, %v432
    %434 = vmatmul.f32.gmra.mxu0 %v371
    %v435 = vpop.f32.mrf.mxu0
    %v436 = vadd.f32 %v322, %v435
    %437 = vdwg.mxu0
    %v438 = vld [vmem:[%s6] sm:$0x1]
    %v440 = vperm.slane %v438, 0
    %v442 = vadd.f32 %v391, %v440
    %v443 = vadd.f32 %v394, %v440
    %v444 = vadd.f32 %v397, %v440
    %v445 = vadd.f32 %v400, %v440
    %v446 = vadd.f32 %v403, %v440
    %v447 = vadd.f32 %v406, %v440
    %v448 = vadd.f32 %v409, %v440
    %v449 = vadd.f32 %v412, %v440
    %v450 = vadd.f32 %v415, %v440
    %v451 = vadd.f32 %v418, %v440
    %v452 = vadd.f32 %v421, %v440
    %v453 = vadd.f32 %v424, %v440
    %v454 = vadd.f32 %v427, %v440
    %v455 = vadd.f32 %v430, %v440
    %v456 = vadd.f32 %v433, %v440
    %v457 = vadd.f32 %v436, %v440
    %v458 = vmax.f32 %v442, 0.0
    %v459 = vmax.f32 %v443, 0.0
    %v460 = vmax.f32 %v444, 0.0
    %v461 = vmax.f32 %v445, 0.0
    %v462 = vmax.f32 %v446, 0.0
    %v463 = vmax.f32 %v447, 0.0
    %v464 = vmax.f32 %v448, 0.0
    %v465 = vmax.f32 %v449, 0.0
    %v466 = vmax.f32 %v450, 0.0
    %v467 = vmax.f32 %v451, 0.0
    %v468 = vmax.f32 %v452, 0.0
    %v469 = vmax.f32 %v453, 0.0
    %v470 = vmax.f32 %v454, 0.0
    %v471 = vmax.f32 %v455, 0.0
    %v472 = vmax.f32 %v456, 0.0
    %v473 = vmax.f32 %v457, 0.0
    %v474 = vld [vmem:[%s7] sm:$0x1]
    %v476 = vperm.slane %v474, 0
    %v478 = vmul.f32 %v458, %v476
    %v479 = vmul.f32 %v459, %v476
    %v480 = vmul.f32 %v460, %v476
    %v481 = vmul.f32 %v461, %v476
    %v482 = vmul.f32 %v462, %v476
    %v483 = vmul.f32 %v463, %v476
    %v484 = vmul.f32 %v464, %v476
    %v485 = vmul.f32 %v465, %v476
    %v486 = vmul.f32 %v466, %v476
    %v487 = vmul.f32 %v467, %v476
    %v488 = vmul.f32 %v468, %v476
    %v489 = vmul.f32 %v469, %v476
    %v490 = vmul.f32 %v470, %v476
    %v491 = vmul.f32 %v471, %v476
    %v492 = vmul.f32 %v472, %v476
    %v493 = vmul.f32 %v473, %v476
    %v494 = vsel %vm324, %v478, 0.0
    %495 = vadd.xlane.f32.xlu0 %v494
    %v496 = vpop.xlane.xlu0 %495
    %v497 = vsel %vm324, %v479, 0.0
    %498 = vadd.xlane.f32.xlu0 %v497
    %v499 = vpop.xlane.xlu0 %498
    %v500 = vsel %vm324, %v480, 0.0
    %501 = vadd.xlane.f32.xlu0 %v500
    %v502 = vpop.xlane.xlu0 %501
    %v503 = vsel %vm324, %v481, 0.0
    %504 = vadd.xlane.f32.xlu0 %v503
    %v505 = vpop.xlane.xlu0 %504
    %v506 = vsel %vm324, %v482, 0.0
    %507 = vadd.xlane.f32.xlu0 %v506
    %v508 = vpop.xlane.xlu0 %507
    %v509 = vsel %vm324, %v483, 0.0
    %510 = vadd.xlane.f32.xlu0 %v509
    %v511 = vpop.xlane.xlu0 %510
    %v512 = vsel %vm324, %v484, 0.0
    %513 = vadd.xlane.f32.xlu0 %v512
    %v514 = vpop.xlane.xlu0 %513
    %v515 = vsel %vm324, %v485, 0.0
    %516 = vadd.xlane.f32.xlu0 %v515
    %v517 = vpop.xlane.xlu0 %516
    %v518 = vsel %vm324, %v486, 0.0
    %519 = vadd.xlane.f32.xlu0 %v518
    %v520 = vpop.xlane.xlu0 %519
    %v521 = vsel %vm324, %v487, 0.0
    %522 = vadd.xlane.f32.xlu0 %v521
    %v523 = vpop.xlane.xlu0 %522
    %v524 = vsel %vm324, %v488, 0.0
    %525 = vadd.xlane.f32.xlu0 %v524
    %v526 = vpop.xlane.xlu0 %525
    %v527 = vsel %vm324, %v489, 0.0
    %528 = vadd.xlane.f32.xlu0 %v527
    %v529 = vpop.xlane.xlu0 %528
    %v530 = vsel %vm324, %v490, 0.0
    %531 = vadd.xlane.f32.xlu0 %v530
    %v532 = vpop.xlane.xlu0 %531
    %v533 = vsel %vm324, %v491, 0.0
    %534 = vadd.xlane.f32.xlu0 %v533
    %v535 = vpop.xlane.xlu0 %534
    %v536 = vsel %vm324, %v492, 0.0
    %537 = vadd.xlane.f32.xlu0 %v536
    %v538 = vpop.xlane.xlu0 %537
    %v539 = vsel %vm324, %v493, 0.0
    %540 = vadd.xlane.f32.xlu0 %v539
    %v541 = vpop.xlane.xlu0 %540
    %s542 = sld [smem:[#allocation2]]
    %v543 = vstv %s542
    %v544 = vadd.f32 %v496, %v543
    %v545 = vadd.f32 %v499, %v543
    %v546 = vadd.f32 %v502, %v543
    %v547 = vadd.f32 %v505, %v543
    %v548 = vadd.f32 %v508, %v543
    %v549 = vadd.f32 %v511, %v543
    %v550 = vadd.f32 %v514, %v543
    %v551 = vadd.f32 %v517, %v543
    %v552 = vadd.f32 %v520, %v543
    %v553 = vadd.f32 %v523, %v543
    %v554 = vadd.f32 %v526, %v543
    %v555 = vadd.f32 %v529, %v543
    %v556 = vadd.f32 %v532, %v543
    %v557 = vadd.f32 %v535, %v543
    %v558 = vadd.f32 %v538, %v543
    %v559 = vadd.f32 %v541, %v543
    %vm560 = vcmask 7168
    %561 = vst.msk [vmem:[#allocation3] sm:$0xff] %vm560, %v544
    %562 = vst.msk [vmem:[#allocation3 + $0x8] sm:$0xff] %vm560, %v545
    %563 = vst.msk [vmem:[#allocation3 + $0x10] sm:$0xff] %vm560, %v546
    %564 = vst.msk [vmem:[#allocation3 + $0x18] sm:$0xff] %vm560, %v547
    %565 = vst.msk [vmem:[#allocation3 + $0x20] sm:$0xff] %vm560, %v548
    %566 = vst.msk [vmem:[#allocation3 + $0x28] sm:$0xff] %vm560, %v549
    %567 = vst.msk [vmem:[#allocation3 + $0x30] sm:$0xff] %vm560, %v550
    %568 = vst.msk [vmem:[#allocation3 + $0x38] sm:$0xff] %vm560, %v551
    %569 = vst.msk [vmem:[#allocation3 + $0x40] sm:$0xff] %vm560, %v552
    %570 = vst.msk [vmem:[#allocation3 + $0x48] sm:$0xff] %vm560, %v553
    %571 = vst.msk [vmem:[#allocation3 + $0x50] sm:$0xff] %vm560, %v554
    %572 = vst.msk [vmem:[#allocation3 + $0x58] sm:$0xff] %vm560, %v555
    %573 = vst.msk [vmem:[#allocation3 + $0x60] sm:$0xff] %vm560, %v556
    %574 = vst.msk [vmem:[#allocation3 + $0x68] sm:$0xff] %vm560, %v557
    %575 = vst.msk [vmem:[#allocation3 + $0x70] sm:$0xff] %vm560, %v558
    %576 = vst.msk [vmem:[#allocation3 + $0x78] sm:$0xff] %vm560, %v559
    // Predicated region
    $region38: #{critic_forward.1} parent=1 // pred_check
      _
    $region39: #{critic_forward.1} parent=1 // pred_check_branch
      %578 = sbr.rel (0) target = $region41
    $region40: #{critic_forward.1} parent=1 // pred_region
      // Predicated region
      $region42: #{critic_forward.1} parent=40 // pred_check
        _
      $region43: #{critic_forward.1} parent=40 // pred_check_branch
        %580 = sbr.rel (0) target = $region45
      $region44: #{critic_forward.1} parent=40 // pred_region
        // Predicated region
        $region46: #{critic_forward.1} parent=44 // pred_check
          _
        $region47: #{critic_forward.1} parent=44 // pred_check_branch
          %582 = sbr.rel (0) target = $region49
        $region48: #{critic_forward.1} parent=44 // pred_region
          // Predicated region
          $region61: #{critic_forward.1} parent=48 // pred_check
            _
          $region62: #{critic_forward.1} parent=48 // pred_check_branch
            %598 = sbr.rel (0) target = $region64
          $region63: #{critic_forward.1} parent=48 // pred_region
            loop: start=0, step=1, limit=1
            $region65: #{critic_forward.1} parent=63 // loop_pre_header
              _
            $region66: #{critic_forward.1} parent=63 // loop_header
              %s600 = sphi 0, %s604
              %p601 = scmp.ge.s32.totalorder %s600, 1
              %s605 = sphi [#allocation3], [#allocation3]
              %s606 = sphi %s9, %s9
            $region67: #{critic_forward.1} parent=63 // loop_header_branch
              %603 = sbr.rel (%p601) target = $region71
            $region68: #{critic_forward.1} parent=63 // loop_body
              %v607 = vld [vmem:[%s605] sm:$0xff]
              %608 = vst [vmem:[%s606] sm:$0xff] %v607
            $region69: #{critic_forward.1} parent=63 // loop_footer
              %s604 = sadd.s32 1, %s600
            $region70: #{critic_forward.1} parent=63 // loop_footer_branch
              %599 = sbr.rel target = $region66
            $region71: #{critic_forward.1} parent=63 // loop_exit
              _
          $region64: #{critic_forward.1} parent=48 // pred_fallthru
            _
          // Predicated region
          $region72: #{critic_forward.1} parent=48 // pred_check
            _
          $region73: #{critic_forward.1} parent=48 // pred_check_branch
            %610 = sbr.rel target = $region75
          $region74: #{critic_forward.1} parent=48 // pred_region
            _
          $region75: #{critic_forward.1} parent=48 // pred_fallthru
            _
        $region49: #{critic_forward.1} parent=44 // pred_fallthru
          _
        // Predicated region
        $region50: #{critic_forward.1} parent=44 // pred_check
          _
        $region51: #{critic_forward.1} parent=44 // pred_check_branch
          %584 = sbr.rel target = $region53
        $region52: #{critic_forward.1} parent=44 // pred_region
          %s586 = ssub.s32 256, 1
          loop: start=0, step=1, limit=1
          $region54: #{critic_forward.1} parent=52 // loop_pre_header
            _
          $region55: #{critic_forward.1} parent=52 // loop_header
            %s588 = sphi 0, %s592
            %p589 = scmp.ge.s32.totalorder %s588, 1
            %s593 = sphi [#allocation3], [#allocation3]
            %s594 = sphi %s9, %s9
          $region56: #{critic_forward.1} parent=52 // loop_header_branch
            %591 = sbr.rel (%p589) target = $region60
          $region57: #{critic_forward.1} parent=52 // loop_body
            %v595 = vld [vmem:[%s593] sm:%s586]
            %596 = vst [vmem:[%s594] sm:%s586] %v595
          $region58: #{critic_forward.1} parent=52 // loop_footer
            %s592 = sadd.s32 1, %s588
          $region59: #{critic_forward.1} parent=52 // loop_footer_branch
            %587 = sbr.rel target = $region55
          $region60: #{critic_forward.1} parent=52 // loop_exit
            _
        $region53: #{critic_forward.1} parent=44 // pred_fallthru
          _
      $region45: #{critic_forward.1} parent=40 // pred_fallthru
        _
      %611 = vnop
    $region41: #{critic_forward.1} parent=1 // pred_fallthru
      _
    // Predicated region
    $region76: #{critic_forward.1} parent=1 // pred_check
      _
    $region77: #{critic_forward.1} parent=1 // pred_check_branch
      %613 = sbr.rel (0) target = $region79
    $region78: #{critic_forward.1} parent=1 // pred_region
      _
    $region79: #{critic_forward.1} parent=1 // pred_fallthru
      _

</llo_original>
